<compile_context>
chip_gen: v7x
topology: tpu7x:2x2x1
jax: 0.10.0
libtpu: 0.0.40
codegen_flags: <defaults>
</compile_context>

<pallas_src>
import functools
import math

import jax
import jax.numpy as jnp
import numpy as np
from jax.experimental import pallas as pl
from jax.experimental.pallas import tpu as pltpu


def _round_up(v, m):
    return ((v + m - 1) // m) * m


def _cdiv(a, b):
    return -(-a // b)


def _gelu_exact(x):
    # PyTorch nn.GELU() default (approximate='none'): 0.5*x*(1+erf(x/sqrt(2)))
    return 0.5 * x * (1.0 + jax.lax.erf(x * (1.0 / math.sqrt(2.0))))


def _choose_tile(n, tile_n, min_steps=2):
    """Lane-tile size: multiple of 128, large enough to bury the ~0.35 us/step
    grid overhead, but split into >= min_steps blocks (when N allows) so the
    'parallel' grid axis shards across both v7x TensorCores.  Rows are divided
    evenly across the step count to keep padding small."""
    n_pad128 = _round_up(max(int(n), 1), 128)
    steps = max(min_steps, _cdiv(n_pad128, max(int(tile_n), 128)))
    tile = _round_up(_cdiv(n_pad128, steps), 128)
    return max(tile, 128)


def _xc_l_kernel(x_ref, w1_ref, b1_ref, w2_ref, b2_ref, w3_ref, b3_ref,
                 w4_ref, b4_ref, o_ref, *, ueg_limit, n_use, lob):
    x = x_ref[...]                                      # (n_in, TILE_N), lane-dense

    # --- Layer 1: n_in (2-3) -> n_hidden on the VPU as broadcast mul-adds.
    # K = 2-3 wastes >=98% of MXU contraction depth and makes the data tile
    # the switch-dominated stationary operand; the unrolled VPU form is cheap
    # (VALU has slack next to the GELU chain) and exact in f32.
    w1 = w1_ref[...]                                    # (n_hidden, n_in)
    h = b1_ref[...] + w1[:, 0:1] * x[0:1, :]
    for k in range(1, n_use):
        h = h + w1[:, k:k + 1] * x[k:k + 1, :]
    h = _gelu_exact(h)

    # --- Layers 2-3: 16x16 MXU matmuls over lane-dense activations ---
    h = _gelu_exact(jnp.dot(w2_ref[...], h,
                            preferred_element_type=jnp.float32) + b2_ref[...])
    h = _gelu_exact(jnp.dot(w3_ref[...], h,
                            preferred_element_type=jnp.float32) + b3_ref[...])

    # Final 16 -> 1 layer as a sublane-weighted sum (VPU mul + XLU reduce),
    # avoiding a degenerate M=1 MXU matmul; stays off the contended slots.
    z = jnp.sum(w4_ref[...] * h, axis=0, keepdims=True) + b4_ref[...]  # (1, TILE_N)

    # --- UEG-limit factor (indices are into the gathered `use` columns) ---
    if ueg_limit:
        u0 = x[0:1, :]                                             # rho[..., use[0]]
        u1 = jnp.tanh(x[1:2, :]) ** 2 if n_use > 1 else 0.0        # tanh(rho[..., use[1]])^2
        unl = (jnp.sum(x[2:, :], axis=0, keepdims=True)            # sum(rho[..., use[2:]])
               if n_use > 2 else 0.0)
        y = z * (u0 + u1 + unl)
    else:
        y = z

    # --- LOB squash: lob * sigmoid(y - log(lob - 1)) - 1 (skipped if lob falsy) ---
    if lob:
        shift = math.log(lob - 1.0)
        y = lob * jax.nn.sigmoid(y - shift) - 1.0

    o_ref[...] = y


def xc_l_forward(rho, params, *, use=(), ueg_limit=False, lob=1.804,
                 tile_n=16384):
    """Pallas implementation of XC_L.forward.

    rho:    (..., n_features) array of density descriptors.
    params: dict with w1..w3 as (out, in), w4 as (n_hidden, 1), biases as (out, 1).
    use:    column indices of rho fed to the net; defaults to range(n_input).
    lob:    Lieb-Oxford bound (must be > 1 if truthy); 0 disables the squash.
    Returns an array of shape rho.shape[:-1].
    """
    n_in = params["w1"].shape[1]
    n_hidden = params["w1"].shape[0]
    use = tuple(int(u) for u in use) if use else tuple(range(n_in))
    assert len(use) == n_in, "len(use) must match the net input width"
    if lob and float(lob) <= 1.0:
        raise ValueError("lob must be > 1 when truthy (log(lob - 1) domain)")

    lead_shape = rho.shape[:-1]
    n = int(np.prod(lead_shape)) if lead_shape else 1

    # Gather `use` columns (skipped when it's the identity), flatten rows,
    # transpose -> (n_in, N): rows on lanes.  XLA fuses this into one copy.
    if use == tuple(range(rho.shape[-1])):
        x = rho.astype(jnp.float32)
    else:
        x = jnp.take(rho, jnp.asarray(use), axis=-1).astype(jnp.float32)
    x = x.reshape(n, n_in).T

    # Lane tile: multiple of 128, >=2 grid steps when N allows (v7x 2 TCs).
    tile = _choose_tile(n, tile_n)
    n_pad = _round_up(n, tile)
    if n_pad != n:
        x = jnp.pad(x, ((0, 0), (0, n_pad - n)))

    kernel = functools.partial(_xc_l_kernel, ueg_limit=bool(ueg_limit),
                               n_use=len(use), lob=float(lob))

    const = lambda shape: pl.BlockSpec(shape, lambda i: (0, 0))

    out = pl.pallas_call(
        kernel,
        out_shape=jax.ShapeDtypeStruct((1, n_pad), jnp.float32),
        grid_spec=pltpu.PrefetchScalarGridSpec(
            num_scalar_prefetch=0,
            grid=(n_pad // tile,),
            in_specs=[
                pl.BlockSpec((n_in, tile), lambda i: (0, i)),
                const((n_hidden, n_in)), const((n_hidden, 1)),
                const((n_hidden, n_hidden)), const((n_hidden, 1)),
                const((n_hidden, n_hidden)), const((n_hidden, 1)),
                const((n_hidden, 1)), const((1, 1)),
            ],
            out_specs=pl.BlockSpec((1, tile), lambda i: (0, i)),
        ),
        compiler_params=pltpu.CompilerParams(
            dimension_semantics=("parallel",),
            vmem_limit_bytes=32 * 1024 * 1024),
    )(x, params["w1"], params["b1"], params["w2"], params["b2"],
      params["w3"], params["b3"], params["w4"], params["b4"])

    return out[0, :n].reshape(lead_shape)


def init_params(key, n_input=2, n_hidden=16):
    """torch.nn.Linear-style init (U(-1/sqrt(fan_in), 1/sqrt(fan_in))).

    Weights stored ready for the lane-dense kernel: w1..w3: (out, in),
    w4: (n_hidden, 1); biases: (out, 1).
    """
    specs = [  # name, shape, fan_in
        ("w1", (n_hidden, n_input), n_input), ("b1", (n_hidden, 1), n_input),
        ("w2", (n_hidden, n_hidden), n_hidden), ("b2", (n_hidden, 1), n_hidden),
        ("w3", (n_hidden, n_hidden), n_hidden), ("b3", (n_hidden, 1), n_hidden),
        ("w4", (n_hidden, 1), n_hidden), ("b4", (1, 1), n_hidden),
    ]
    keys = jax.random.split(key, len(specs))
    params = {}
    for k, (name, shape, fan_in) in zip(keys, specs):
        bound = 1.0 / math.sqrt(fan_in)
        params[name] = jax.random.uniform(k, shape, minval=-bound,
                                          maxval=bound, dtype=jnp.float32)
    return params


def xc_l_reference(rho, params, *, use=(), ueg_limit=False, lob=1.804):
    """Pure-JAX reference matching XC_L.forward (float32)."""
    n_in = params["w1"].shape[1]
    use = tuple(int(u) for u in use) if use else tuple(range(n_in))
    x = jnp.take(rho, jnp.asarray(use), axis=-1).astype(jnp.float32)
    hp = jax.lax.Precision.HIGHEST
    h = _gelu_exact(jnp.einsum('...i,hi->...h', x, params["w1"],
                               precision=hp) + params["b1"][:, 0])
    h = _gelu_exact(jnp.einsum('...i,hi->...h', h, params["w2"],
                               precision=hp) + params["b2"][:, 0])
    h = _gelu_exact(jnp.einsum('...i,hi->...h', h, params["w3"],
                               precision=hp) + params["b3"][:, 0])
    squeezed = (jnp.einsum('...h,h->...', h, params["w4"][:, 0], precision=hp)
                + params["b4"][0, 0])
    if ueg_limit:
        u0 = x[..., 0]
        u1 = jnp.tanh(x[..., 1]) ** 2 if len(use) > 1 else 0.0
        unl = jnp.sum(x[..., 2:], axis=-1) if len(use) > 2 else 0.0
        y = squeezed * (u0 + u1 + unl)
    else:
        y = squeezed
    if lob:
        y = lob * jax.nn.sigmoid(y - math.log(lob - 1.0)) - 1.0
    return y


if __name__ == "__main__":
    key = jax.random.PRNGKey(0)
    k1, k2, k3, k4 = jax.random.split(key, 4)

    # GGA-like exchange model: n_input=2, three hidden GELU layers of width 16.
    params2 = init_params(k1, n_input=2, n_hidden=16)

    # 1) Default config: use=() -> arange(n_input), ueg_limit=False, lob=1.804.
    #    (identity `use` -> wrapper skips the gather)
    rho_a = jax.random.uniform(k2, (8, 16, 2), dtype=jnp.float32)
    out1 = jax.block_until_ready(xc_l_forward(rho_a, params2))
    ref1 = xc_l_reference(rho_a, params2)
    np.testing.assert_allclose(np.asarray(out1), np.asarray(ref1),
                               rtol=1e-5, atol=1e-5)

    # 2) Column gather + UEG-limit path (use=[1,2] into a 3-feature rho),
    #    non-multiple-of-tile row count -> padding + a multi-step grid
    #    (485 rows -> tile 256, 2 grid steps via the min-2-steps cap).
    rho_b = jax.random.uniform(k3, (5, 97, 3), dtype=jnp.float32) * 2.0 - 1.0
    out2 = jax.block_until_ready(
        xc_l_forward(rho_b, params2, use=(1, 2), ueg_limit=True))
    ref2 = xc_l_reference(rho_b, params2, use=(1, 2), ueg_limit=True)
    np.testing.assert_allclose(np.asarray(out2), np.asarray(ref2),
                               rtol=1e-5, atol=1e-5)

    # 3) meta-GGA-like: n_input=3, UEG limit with nonlocal sum term, LOB
    #    disabled; also exercises an explicit tile_n override.
    params3 = init_params(k4, n_input=3, n_hidden=16)
    rho_c = jax.random.uniform(k2, (4, 32, 3), dtype=jnp.float32)
    out3 = jax.block_until_ready(
        xc_l_forward(rho_c, params3, ueg_limit=True, lob=0.0, tile_n=256))
    ref3 = xc_l_reference(rho_c, params3, ueg_limit=True, lob=0.0)
    np.testing.assert_allclose(np.asarray(out3), np.asarray(ref3),
                               rtol=1e-5, atol=1e-5)

    print("KERNEL_OK")
</pallas_src>

<mosaic_0001>
module attributes {stable_mosaic.version = 11 : i64} {
  func.func @_xc_l_kernel(%arg0: i32, %arg1: memref<2x128xf32, #tpu.memory_space<vmem>>, %arg2: memref<16x2xf32, #tpu.memory_space<vmem>>, %arg3: memref<16x1xf32, #tpu.memory_space<vmem>>, %arg4: memref<16x16xf32, #tpu.memory_space<vmem>>, %arg5: memref<16x1xf32, #tpu.memory_space<vmem>>, %arg6: memref<16x16xf32, #tpu.memory_space<vmem>>, %arg7: memref<16x1xf32, #tpu.memory_space<vmem>>, %arg8: memref<16x1xf32, #tpu.memory_space<vmem>>, %arg9: memref<1x1xf32, #tpu.memory_space<vmem>>, %arg10: memref<1x128xf32, #tpu.memory_space<vmem>>) attributes {dimension_semantics = [#tpu.dimension_semantics<parallel>], iteration_bounds = array<i64: 1>, scalar_prefetch = 0 : i64, scratch_operands = 0 : i64, tpu.core_type = #tpu.core_type<tc>, window_params = [{transform_indices = @transform_0, window_bounds = array<i64: 2, 128>}, {pipeline_mode = #tpu.pipeline_mode<synchronous>, transform_indices = @transform_1, window_bounds = array<i64: 16, 2>}, {pipeline_mode = #tpu.pipeline_mode<synchronous>, transform_indices = @transform_2, window_bounds = array<i64: 16, 1>}, {pipeline_mode = #tpu.pipeline_mode<synchronous>, transform_indices = @transform_3, window_bounds = array<i64: 16, 16>}, {pipeline_mode = #tpu.pipeline_mode<synchronous>, transform_indices = @transform_4, window_bounds = array<i64: 16, 1>}, {pipeline_mode = #tpu.pipeline_mode<synchronous>, transform_indices = @transform_5, window_bounds = array<i64: 16, 16>}, {pipeline_mode = #tpu.pipeline_mode<synchronous>, transform_indices = @transform_6, window_bounds = array<i64: 16, 1>}, {pipeline_mode = #tpu.pipeline_mode<synchronous>, transform_indices = @transform_7, window_bounds = array<i64: 16, 1>}, {pipeline_mode = #tpu.pipeline_mode<synchronous>, transform_indices = @transform_8, window_bounds = array<i64: 1, 1>}, {transform_indices = @transform_9, window_bounds = array<i64: 1, 128>}]} {
    %c0 = arith.constant 0 : index
    %c0_0 = arith.constant 0 : index
    %0 = vector.load %arg1[%c0, %c0_0] : memref<2x128xf32, #tpu.memory_space<vmem>>, vector<2x128xf32>
    %c0_1 = arith.constant 0 : index
    %c0_2 = arith.constant 0 : index
    %1 = vector.load %arg2[%c0_1, %c0_2] : memref<16x2xf32, #tpu.memory_space<vmem>>, vector<16x2xf32>
    %c0_3 = arith.constant 0 : index
    %c0_4 = arith.constant 0 : index
    %2 = vector.load %arg3[%c0_3, %c0_4] : memref<16x1xf32, #tpu.memory_space<vmem>>, vector<16x1xf32>
    %3 = vector.extract_strided_slice %1 {offsets = [0, 0], sizes = [16, 1], strides = [1, 1]} : vector<16x2xf32> to vector<16x1xf32>
    %4 = vector.extract_strided_slice %0 {offsets = [0, 0], sizes = [1, 128], strides = [1, 1]} : vector<2x128xf32> to vector<1x128xf32>
    %5 = vector.broadcast %3 : vector<16x1xf32> to vector<16x128xf32>
    %6 = vector.broadcast %4 : vector<1x128xf32> to vector<16x128xf32>
    %7 = arith.mulf %5, %6 : vector<16x128xf32>
    %8 = vector.broadcast %2 : vector<16x1xf32> to vector<16x128xf32>
    %9 = arith.addf %8, %7 : vector<16x128xf32>
    %10 = vector.extract_strided_slice %1 {offsets = [0, 1], sizes = [16, 1], strides = [1, 1]} : vector<16x2xf32> to vector<16x1xf32>
    %11 = vector.extract_strided_slice %0 {offsets = [1, 0], sizes = [1, 128], strides = [1, 1]} : vector<2x128xf32> to vector<1x128xf32>
    %12 = vector.broadcast %10 : vector<16x1xf32> to vector<16x128xf32>
    %13 = vector.broadcast %11 : vector<1x128xf32> to vector<16x128xf32>
    %14 = arith.mulf %12, %13 : vector<16x128xf32>
    %15 = arith.addf %9, %14 : vector<16x128xf32>
    %cst = arith.constant 5.000000e-01 : f32
    %16 = vector.broadcast %cst : f32 to vector<16x128xf32>
    %17 = arith.mulf %16, %15 : vector<16x128xf32>
    %cst_5 = arith.constant 0.707106769 : f32
    %18 = vector.broadcast %cst_5 : f32 to vector<16x128xf32>
    %19 = arith.mulf %15, %18 : vector<16x128xf32>
    %20 = math.erf %19 : vector<16x128xf32>
    %cst_6 = arith.constant 1.000000e+00 : f32
    %21 = vector.broadcast %cst_6 : f32 to vector<16x128xf32>
    %22 = arith.addf %21, %20 : vector<16x128xf32>
    %23 = arith.mulf %17, %22 : vector<16x128xf32>
    %c0_7 = arith.constant 0 : index
    %c0_8 = arith.constant 0 : index
    %24 = vector.load %arg4[%c0_7, %c0_8] : memref<16x16xf32, #tpu.memory_space<vmem>>, vector<16x16xf32>
    %cst_9 = arith.constant dense<0.000000e+00> : vector<16x128xf32>
    %25 = tpu.matmul %24, %23, %cst_9 {dimension_numbers = #tpu.dot_dimension_numbers<[1], [0], [0], [1], [0, 0, 1, 1], [], []>} : vector<16x16xf32>, vector<16x128xf32>, vector<16x128xf32> -> vector<16x128xf32>
    %c0_10 = arith.constant 0 : index
    %c0_11 = arith.constant 0 : index
    %26 = vector.load %arg5[%c0_10, %c0_11] : memref<16x1xf32, #tpu.memory_space<vmem>>, vector<16x1xf32>
    %27 = vector.broadcast %26 : vector<16x1xf32> to vector<16x128xf32>
    %28 = arith.addf %25, %27 : vector<16x128xf32>
    %cst_12 = arith.constant 5.000000e-01 : f32
    %29 = vector.broadcast %cst_12 : f32 to vector<16x128xf32>
    %30 = arith.mulf %29, %28 : vector<16x128xf32>
    %cst_13 = arith.constant 0.707106769 : f32
    %31 = vector.broadcast %cst_13 : f32 to vector<16x128xf32>
    %32 = arith.mulf %28, %31 : vector<16x128xf32>
    %33 = math.erf %32 : vector<16x128xf32>
    %cst_14 = arith.constant 1.000000e+00 : f32
    %34 = vector.broadcast %cst_14 : f32 to vector<16x128xf32>
    %35 = arith.addf %34, %33 : vector<16x128xf32>
    %36 = arith.mulf %30, %35 : vector<16x128xf32>
    %c0_15 = arith.constant 0 : index
    %c0_16 = arith.constant 0 : index
    %37 = vector.load %arg6[%c0_15, %c0_16] : memref<16x16xf32, #tpu.memory_space<vmem>>, vector<16x16xf32>
    %cst_17 = arith.constant dense<0.000000e+00> : vector<16x128xf32>
    %38 = tpu.matmul %37, %36, %cst_17 {dimension_numbers = #tpu.dot_dimension_numbers<[1], [0], [0], [1], [0, 0, 1, 1], [], []>} : vector<16x16xf32>, vector<16x128xf32>, vector<16x128xf32> -> vector<16x128xf32>
    %c0_18 = arith.constant 0 : index
    %c0_19 = arith.constant 0 : index
    %39 = vector.load %arg7[%c0_18, %c0_19] : memref<16x1xf32, #tpu.memory_space<vmem>>, vector<16x1xf32>
    %40 = vector.broadcast %39 : vector<16x1xf32> to vector<16x128xf32>
    %41 = arith.addf %38, %40 : vector<16x128xf32>
    %cst_20 = arith.constant 5.000000e-01 : f32
    %42 = vector.broadcast %cst_20 : f32 to vector<16x128xf32>
    %43 = arith.mulf %42, %41 : vector<16x128xf32>
    %cst_21 = arith.constant 0.707106769 : f32
    %44 = vector.broadcast %cst_21 : f32 to vector<16x128xf32>
    %45 = arith.mulf %41, %44 : vector<16x128xf32>
    %46 = math.erf %45 : vector<16x128xf32>
    %cst_22 = arith.constant 1.000000e+00 : f32
    %47 = vector.broadcast %cst_22 : f32 to vector<16x128xf32>
    %48 = arith.addf %47, %46 : vector<16x128xf32>
    %49 = arith.mulf %43, %48 : vector<16x128xf32>
    %c0_23 = arith.constant 0 : index
    %c0_24 = arith.constant 0 : index
    %50 = vector.load %arg8[%c0_23, %c0_24] : memref<16x1xf32, #tpu.memory_space<vmem>>, vector<16x1xf32>
    %51 = vector.broadcast %50 : vector<16x1xf32> to vector<16x128xf32>
    %52 = arith.mulf %51, %49 : vector<16x128xf32>
    %cst_25 = arith.constant dense<0.000000e+00> : vector<128xf32>
    %53 = vector.multi_reduction <add>, %52, %cst_25 [0] : vector<16x128xf32> to vector<128xf32>
    %54 = vector.shape_cast %53 : vector<128xf32> to vector<1x128xf32>
    %c0_26 = arith.constant 0 : index
    %c0_27 = arith.constant 0 : index
    %55 = vector.load %arg9[%c0_26, %c0_27] : memref<1x1xf32, #tpu.memory_space<vmem>>, vector<1x1xf32>
    %56 = vector.broadcast %55 : vector<1x1xf32> to vector<1x128xf32>
    %57 = arith.addf %54, %56 : vector<1x128xf32>
    %cst_28 = arith.constant -0.21815601 : f32
    %58 = vector.broadcast %cst_28 : f32 to vector<1x128xf32>
    %59 = arith.subf %57, %58 : vector<1x128xf32>
    %60 = arith.negf %59 : vector<1x128xf32>
    %61 = math.exp %60 : vector<1x128xf32>
    %cst_29 = arith.constant 1.000000e+00 : f32
    %62 = vector.broadcast %cst_29 : f32 to vector<1x128xf32>
    %63 = arith.addf %62, %61 : vector<1x128xf32>
    %64 = arith.divf %62, %63 : vector<1x128xf32>
    %cst_30 = arith.constant 1.804000e+00 : f32
    %65 = vector.broadcast %cst_30 : f32 to vector<1x128xf32>
    %66 = arith.mulf %65, %64 : vector<1x128xf32>
    %cst_31 = arith.constant 1.000000e+00 : f32
    %67 = vector.broadcast %cst_31 : f32 to vector<1x128xf32>
    %68 = arith.subf %66, %67 : vector<1x128xf32>
    %c0_32 = arith.constant 0 : index
    %c0_33 = arith.constant 0 : index
    %69 = vector.load %arg10[%c0_32, %c0_33] : memref<1x128xf32, #tpu.memory_space<vmem>>, vector<1x128xf32>
    tpu.vector_store %arg10[%c0_32, %c0_33], %68 {strides = array<i32>} : memref<1x128xf32, #tpu.memory_space<vmem>>, vector<1x128xf32>,
    return
  }
  func.func @transform_0(%arg0: i32) -> (i32, i32) {
    %c0_i32 = arith.constant 0 : i32
    %c0_i32_0 = arith.constant 0 : i32
    return %c0_i32, %arg0 : i32, i32
  }
  func.func @transform_1(%arg0: i32) -> (i32, i32) {
    %c0_i32 = arith.constant 0 : i32
    %c0_i32_0 = arith.constant 0 : i32
    %c0_i32_1 = arith.constant 0 : i32
    return %c0_i32, %c0_i32_0 : i32, i32
  }
  func.func @transform_2(%arg0: i32) -> (i32, i32) {
    %c0_i32 = arith.constant 0 : i32
    %c0_i32_0 = arith.constant 0 : i32
    %c0_i32_1 = arith.constant 0 : i32
    return %c0_i32, %c0_i32_0 : i32, i32
  }
  func.func @transform_3(%arg0: i32) -> (i32, i32) {
    %c0_i32 = arith.constant 0 : i32
    %c0_i32_0 = arith.constant 0 : i32
    %c0_i32_1 = arith.constant 0 : i32
    return %c0_i32, %c0_i32_0 : i32, i32
  }
  func.func @transform_4(%arg0: i32) -> (i32, i32) {
    %c0_i32 = arith.constant 0 : i32
    %c0_i32_0 = arith.constant 0 : i32
    %c0_i32_1 = arith.constant 0 : i32
    return %c0_i32, %c0_i32_0 : i32, i32
  }
  func.func @transform_5(%arg0: i32) -> (i32, i32) {
    %c0_i32 = arith.constant 0 : i32
    %c0_i32_0 = arith.constant 0 : i32
    %c0_i32_1 = arith.constant 0 : i32
    return %c0_i32, %c0_i32_0 : i32, i32
  }
  func.func @transform_6(%arg0: i32) -> (i32, i32) {
    %c0_i32 = arith.constant 0 : i32
    %c0_i32_0 = arith.constant 0 : i32
    %c0_i32_1 = arith.constant 0 : i32
    return %c0_i32, %c0_i32_0 : i32, i32
  }
  func.func @transform_7(%arg0: i32) -> (i32, i32) {
    %c0_i32 = arith.constant 0 : i32
    %c0_i32_0 = arith.constant 0 : i32
    %c0_i32_1 = arith.constant 0 : i32
    return %c0_i32, %c0_i32_0 : i32, i32
  }
  func.func @transform_8(%arg0: i32) -> (i32, i32) {
    %c0_i32 = arith.constant 0 : i32
    %c0_i32_0 = arith.constant 0 : i32
    %c0_i32_1 = arith.constant 0 : i32
    return %c0_i32, %c0_i32_0 : i32, i32
  }
  func.func @transform_9(%arg0: i32) -> (i32, i32) {
    %c0_i32 = arith.constant 0 : i32
    %c0_i32_0 = arith.constant 0 : i32
    return %c0_i32, %arg0 : i32, i32
  }
}

</mosaic_0001>

<llo_original>
// kernel: tpu_custom_call.1
$region0: #{tpu_custom_call.1}
  #allocation0 [shape = 'u32[]', space=smem, size = 0x4, offset = 0x4, fixed_abs, tag = 'smem constant byte address 0x4 - core index']
  #allocation1 [shape = 'u32[144,128]{1,0:T(1,128)}', space=vmem, size = 0x12000, scoped, tag = 'internal scratch']
  #allocation2 [shape = 'f32[1,1]{1,0:T(1,128)S(1)}', space=vmem, size = 0x200, scoped, tag = 'scoped memory for tpu_custom_call.1']
  %s0 = inlined_call_operand.vmem [shape: f32[2,128], index: 0, kind: input, shape index: {}]
  %s1 = inlined_call_operand.vmem [shape: f32[16,2], index: 1, kind: input, shape index: {}]
  %s2 = inlined_call_operand.vmem [shape: f32[16,1], index: 2, kind: input, shape index: {}]
  %s3 = inlined_call_operand.vmem [shape: f32[16,16], index: 3, kind: input, shape index: {}]
  %s4 = inlined_call_operand.vmem [shape: f32[16,1], index: 4, kind: input, shape index: {}]
  %s5 = inlined_call_operand.vmem [shape: f32[16,16], index: 5, kind: input, shape index: {}]
  %s6 = inlined_call_operand.vmem [shape: f32[16,1], index: 6, kind: input, shape index: {}]
  %s7 = inlined_call_operand.vmem [shape: f32[16,1], index: 7, kind: input, shape index: {}]
  %s8 = inlined_call_operand.<no memory space> [shape: f32[1,1], index: 8, kind: input, shape index: {}]
  %s9 = inlined_call_operand.hbm [shape: f32[1,128], index: 9, kind: output, shape index: {}]
  %s10 = sld [smem:[#allocation0]]
  $region46: #{tpu_custom_call.1} parent=0
    _
  %s12 = ssub.s32 1, %s10
  %s13 = scalar_select 0, %s12, %s10
  %v14 = vstv %s8
  %15 = vst [vmem:[#allocation2] sm:$0x1] %v14
  $region1: #{tpu_custom_call.1} parent=0
    #allocation3 [shape = 'u8[512]{0}', space=vmem, size = 0x400, scoped, tag = 'output window, operand 0, single buffered']
    #allocation4 [shape = 's32[1]{0}', space=sflag, size = 0x4, scoped, tag = 'scoped memory for tpu_custom_call.1']
    %16 = vsyncpa [#allocation4], 0
    // Predicated region
    $region2: #{tpu_custom_call.1} parent=1 // pred_check
      _
    $region3: #{tpu_custom_call.1} parent=1 // pred_check_branch
      %18 = sbr.rel (0) target = $region5
    $region4: #{tpu_custom_call.1} parent=1 // pred_region
      _
    $region5: #{tpu_custom_call.1} parent=1 // pred_fallthru
      _
    // Predicated region
    $region6: #{tpu_custom_call.1} parent=1 // pred_check
      _
    $region7: #{tpu_custom_call.1} parent=1 // pred_check_branch
      %20 = sbr.rel (0) target = $region9
    $region8: #{tpu_custom_call.1} parent=1 // pred_region
      _
    $region9: #{tpu_custom_call.1} parent=1 // pred_fallthru
      _
    // Predicated region
    $region10: #{tpu_custom_call.1} parent=1 // pred_check
      _
    $region11: #{tpu_custom_call.1} parent=1 // pred_check_branch
      %22 = sbr.rel (0) target = $region13
    $region12: #{tpu_custom_call.1} parent=1 // pred_region
      _
    $region13: #{tpu_custom_call.1} parent=1 // pred_fallthru
      _
    // Predicated region
    $region14: #{tpu_custom_call.1} parent=1 // pred_check
      _
    $region15: #{tpu_custom_call.1} parent=1 // pred_check_branch
      %24 = sbr.rel (0) target = $region17
    $region16: #{tpu_custom_call.1} parent=1 // pred_region
      _
    $region17: #{tpu_custom_call.1} parent=1 // pred_fallthru
      _
    // Predicated region
    $region18: #{tpu_custom_call.1} parent=1 // pred_check
      _
    $region19: #{tpu_custom_call.1} parent=1 // pred_check_branch
      %26 = sbr.rel (0) target = $region21
    $region20: #{tpu_custom_call.1} parent=1 // pred_region
      _
    $region21: #{tpu_custom_call.1} parent=1 // pred_fallthru
      _
    // Predicated region
    $region22: #{tpu_custom_call.1} parent=1 // pred_check
      _
    $region23: #{tpu_custom_call.1} parent=1 // pred_check_branch
      %28 = sbr.rel (0) target = $region25
    $region24: #{tpu_custom_call.1} parent=1 // pred_region
      _
    $region25: #{tpu_custom_call.1} parent=1 // pred_fallthru
      _
    // Predicated region
    $region26: #{tpu_custom_call.1} parent=1 // pred_check
      _
    $region27: #{tpu_custom_call.1} parent=1 // pred_check_branch
      %30 = sbr.rel (0) target = $region29
    $region28: #{tpu_custom_call.1} parent=1 // pred_region
      _
    $region29: #{tpu_custom_call.1} parent=1 // pred_fallthru
      _
    // Predicated region
    $region30: #{tpu_custom_call.1} parent=1 // pred_check
      _
    $region31: #{tpu_custom_call.1} parent=1 // pred_check_branch
      %32 = sbr.rel (0) target = $region33
    $region32: #{tpu_custom_call.1} parent=1 // pred_region
      _
    $region33: #{tpu_custom_call.1} parent=1 // pred_fallthru
      _
    // Predicated region
    $region34: #{tpu_custom_call.1} parent=1 // pred_check
      _
    $region35: #{tpu_custom_call.1} parent=1 // pred_check_branch
      %34 = sbr.rel (0) target = $region37
    $region36: #{tpu_custom_call.1} parent=1 // pred_region
      _
    $region37: #{tpu_custom_call.1} parent=1 // pred_fallthru
      _
    %v35 = vld [vmem:[%s0] sm:$0x3]
    %v36 = vld [vmem:[%s1] sm:$0xff]
    %v37 = vld [vmem:[%s1 + $0x8] sm:$0xff]
    %v38 = vld [vmem:[%s2] sm:$0xff]
    %v39 = vld [vmem:[%s2 + $0x8] sm:$0xff]
    %41 = vset.pattern.permute.xlu0 0
    %42 = vperm.xlu0 %41, %v36
    %v43 = vpop.permute.xlu0 %42
    %46 = vset.pattern.permute.xlu0 0
    %47 = vperm.xlu0 %46, %v37
    %v48 = vpop.permute.xlu0 %47
    %v50 = vlaneseq
    %v51 = vshrl.u32 %v50, 7
    %v52 = vsub.s32 0, %v51
    %v53 = vrot.slane %v35, %v52
    %v54 = vmul.f32 %v43, %v53
    %v55 = vmul.f32 %v48, %v53
    %57 = vset.pattern.permute.xlu0 0
    %58 = vperm.xlu0 %57, %v38
    %v59 = vpop.permute.xlu0 %58
    %62 = vset.pattern.permute.xlu0 0
    %63 = vperm.xlu0 %62, %v39
    %v64 = vpop.permute.xlu0 %63
    %v66 = vadd.f32 %v59, %v54
    %v67 = vadd.f32 %v64, %v55
    %68 = vset.pattern.permute.xlu0 1
    %69 = vperm.xlu0 %68, %v36
    %v70 = vpop.permute.xlu0 %69
    %72 = vset.pattern.permute.xlu0 1
    %73 = vperm.xlu0 %72, %v37
    %v74 = vpop.permute.xlu0 %73
    %v76 = vlaneseq
    %v77 = vshrl.u32 %v76, 7
    %v78 = vsub.s32 1, %v77
    %v79 = vrot.slane %v35, %v78
    %v80 = vmul.f32 %v70, %v79
    %v81 = vmul.f32 %v74, %v79
    %v82 = vadd.f32 %v66, %v80
    %v83 = vadd.f32 %v67, %v81
    %v84 = vmul.f32 %v82, 0.5
    %v85 = vmul.f32 %v83, 0.5
    %v86 = vmul.f32 %v82, 0.70710677
    %v87 = vmul.f32 %v83, 0.70710677
    %v88 = verf.f32.pop %v86
    %v89 = verf.f32.pop %v87
    %v90 = vadd.f32 %v88, 1.0
    %v91 = vadd.f32 %v89, 1.0
    %v92 = vmul.f32 %v84, %v90
    %v93 = vmul.f32 %v85, %v91
    %v94 = vld [vmem:[%s3] sm:$0xff]
    %v95 = vld [vmem:[%s3 + $0x8] sm:$0xff]
    %v96 = vld [vmem:[%s4] sm:$0xff]
    %v97 = vld [vmem:[%s4 + $0x8] sm:$0xff]
    %99 = vset.pattern.permute.xlu0 0
    %100 = vperm.xlu0 %99, %v96
    %v101 = vpop.permute.xlu0 %100
    %104 = vset.pattern.permute.xlu0 0
    %105 = vperm.xlu0 %104, %v97
    %v106 = vpop.permute.xlu0 %105
    %vm108 = vcmask 130048
    %v110 = vsel %vm108, %v94, 0
    %v113 = vsel %vm108, %v95, 0
    %115 = vmatprep.subr.mxu0 0.0
    %116 = vmatpush1.msra.mxu0 %v92
    %117 = vmatprep.subr.mxu0 0.0
    %118 = vmatpush1.msra.mxu0 %v93
    %119 = vmatprep.subr.mxu0 0.0
    %120 = vmatpush1.msra.mxu0 0.0
    %121 = vmatprep.subr.mxu0 0.0
    %122 = vmatpush1.msra.mxu0 0.0
    %123 = vmatprep.subr.mxu0 0.0
    %124 = vmatpush1.msra.mxu0 0.0
    %125 = vmatprep.subr.mxu0 0.0
    %126 = vmatpush1.msra.mxu0 0.0
    %127 = vmatprep.subr.mxu0 0.0
    %128 = vmatpush1.msra.mxu0 0.0
    %129 = vmatprep.subr.mxu0 0.0
    %130 = vmatpush1.msra.mxu0 0.0
    %131 = vmatprep.subr.mxu0 0.0
    %132 = vmatpush1.msra.mxu0 0.0
    %133 = vmatprep.subr.mxu0 0.0
    %134 = vmatpush1.msra.mxu0 0.0
    %135 = vmatprep.subr.mxu0 0.0
    %136 = vmatpush1.msra.mxu0 0.0
    %137 = vmatprep.subr.mxu0 0.0
    %138 = vmatpush1.msra.mxu0 0.0
    %139 = vmatprep.subr.mxu0 0.0
    %140 = vmatpush1.msra.mxu0 0.0
    %141 = vmatprep.subr.mxu0 0.0
    %142 = vmatpush1.msra.mxu0 0.0
    %143 = vmatprep.subr.mxu0 0.0
    %144 = vmatpush1.msra.mxu0 0.0
    %145 = vmatprep.subr.mxu0 0.0
    %146 = vmatpush1.msra.mxu0 0.0
    %147 = vmatprep.subr.mxu0 0.0
    %148 = vmatpush1.msra.mxu0 0.0
    %149 = vmatprep.subr.mxu0 0.0
    %150 = vmatpush1.msra.mxu0 0.0
    %151 = vmatprep.subr.mxu0 0.0
    %152 = vmatpush1.msra.mxu0 0.0
    %153 = vmatprep.subr.mxu0 0.0
    %154 = vmatpush1.msra.mxu0 0.0
    %155 = vmatprep.subr.mxu0 0.0
    %156 = vmatpush1.msra.mxu0 0.0
    %157 = vmatprep.subr.mxu0 0.0
    %158 = vmatpush1.msra.mxu0 0.0
    %159 = vmatprep.subr.mxu0 0.0
    %160 = vmatpush1.msra.mxu0 0.0
    %161 = vmatprep.subr.mxu0 0.0
    %162 = vmatpush1.msra.mxu0 0.0
    %163 = vmatprep.subr.mxu0 0.0
    %164 = vmatpush1.msra.mxu0 0.0
    %165 = vmatprep.subr.mxu0 0.0
    %166 = vmatpush1.msra.mxu0 0.0
    %167 = vmatprep.subr.mxu0 0.0
    %168 = vmatpush1.msra.mxu0 0.0
    %169 = vmatprep.subr.mxu0 0.0
    %170 = vmatpush1.msra.mxu0 0.0
    %171 = vmatprep.subr.mxu0 0.0
    %172 = vmatpush1.msra.mxu0 0.0
    %173 = vmatprep.subr.mxu0 0.0
    %174 = vmatpush1.msra.mxu0 0.0
    %175 = vmatprep.subr.mxu0 0.0
    %176 = vmatpush1.msra.mxu0 0.0
    %177 = vmatprep.subr.mxu0 0.0
    %178 = vmatpush1.msra.mxu0 0.0
    %179 = vmatprep.mubr.f32.mxu0 0.0
    %180 = vmatmul.mubr.f32.gmra.mrb[0].mxu0 %v110
    %v181 = vpop.f32.mrb[0].mxu0
    %v182 = vadd.f32 %v101, %v181
    %v183 = vpop.f32.mrb[0].mxu0
    %184 = vmatprep.mubr.f32.mxu0 0.0
    %185 = vmatmul.mubr.f32.gmra.mrb[0].mxu0 %v113
    %v186 = vpop.f32.mrb[0].mxu0
    %v187 = vadd.f32 %v106, %v186
    %v188 = vpop.f32.mrb[0].mxu0
    %189 = vdwg.mxu0
    %v190 = vmul.f32 %v182, 0.5
    %v191 = vmul.f32 %v187, 0.5
    %v192 = vmul.f32 %v182, 0.70710677
    %v193 = vmul.f32 %v187, 0.70710677
    %v194 = verf.f32.pop %v192
    %v195 = verf.f32.pop %v193
    %v196 = vadd.f32 %v194, 1.0
    %v197 = vadd.f32 %v195, 1.0
    %v198 = vmul.f32 %v190, %v196
    %v199 = vmul.f32 %v191, %v197
    %v200 = vld [vmem:[%s5] sm:$0xff]
    %v201 = vld [vmem:[%s5 + $0x8] sm:$0xff]
    %v202 = vld [vmem:[%s6] sm:$0xff]
    %v203 = vld [vmem:[%s6 + $0x8] sm:$0xff]
    %205 = vset.pattern.permute.xlu0 0
    %206 = vperm.xlu0 %205, %v202
    %v207 = vpop.permute.xlu0 %206
    %210 = vset.pattern.permute.xlu0 0
    %211 = vperm.xlu0 %210, %v203
    %v212 = vpop.permute.xlu0 %211
    %v215 = vsel %vm108, %v200, 0
    %v218 = vsel %vm108, %v201, 0
    %220 = vmatprep.subr.mxu0 0.0
    %221 = vmatpush1.msra.mxu0 %v198
    %222 = vmatprep.subr.mxu0 0.0
    %223 = vmatpush1.msra.mxu0 %v199
    %224 = vmatprep.subr.mxu0 0.0
    %225 = vmatpush1.msra.mxu0 0.0
    %226 = vmatprep.subr.mxu0 0.0
    %227 = vmatpush1.msra.mxu0 0.0
    %228 = vmatprep.subr.mxu0 0.0
    %229 = vmatpush1.msra.mxu0 0.0
    %230 = vmatprep.subr.mxu0 0.0
    %231 = vmatpush1.msra.mxu0 0.0
    %232 = vmatprep.subr.mxu0 0.0
    %233 = vmatpush1.msra.mxu0 0.0
    %234 = vmatprep.subr.mxu0 0.0
    %235 = vmatpush1.msra.mxu0 0.0
    %236 = vmatprep.subr.mxu0 0.0
    %237 = vmatpush1.msra.mxu0 0.0
    %238 = vmatprep.subr.mxu0 0.0
    %239 = vmatpush1.msra.mxu0 0.0
    %240 = vmatprep.subr.mxu0 0.0
    %241 = vmatpush1.msra.mxu0 0.0
    %242 = vmatprep.subr.mxu0 0.0
    %243 = vmatpush1.msra.mxu0 0.0
    %244 = vmatprep.subr.mxu0 0.0
    %245 = vmatpush1.msra.mxu0 0.0
    %246 = vmatprep.subr.mxu0 0.0
    %247 = vmatpush1.msra.mxu0 0.0
    %248 = vmatprep.subr.mxu0 0.0
    %249 = vmatpush1.msra.mxu0 0.0
    %250 = vmatprep.subr.mxu0 0.0
    %251 = vmatpush1.msra.mxu0 0.0
    %252 = vmatprep.subr.mxu0 0.0
    %253 = vmatpush1.msra.mxu0 0.0
    %254 = vmatprep.subr.mxu0 0.0
    %255 = vmatpush1.msra.mxu0 0.0
    %256 = vmatprep.subr.mxu0 0.0
    %257 = vmatpush1.msra.mxu0 0.0
    %258 = vmatprep.subr.mxu0 0.0
    %259 = vmatpush1.msra.mxu0 0.0
    %260 = vmatprep.subr.mxu0 0.0
    %261 = vmatpush1.msra.mxu0 0.0
    %262 = vmatprep.subr.mxu0 0.0
    %263 = vmatpush1.msra.mxu0 0.0
    %264 = vmatprep.subr.mxu0 0.0
    %265 = vmatpush1.msra.mxu0 0.0
    %266 = vmatprep.subr.mxu0 0.0
    %267 = vmatpush1.msra.mxu0 0.0
    %268 = vmatprep.subr.mxu0 0.0
    %269 = vmatpush1.msra.mxu0 0.0
    %270 = vmatprep.subr.mxu0 0.0
    %271 = vmatpush1.msra.mxu0 0.0
    %272 = vmatprep.subr.mxu0 0.0
    %273 = vmatpush1.msra.mxu0 0.0
    %274 = vmatprep.subr.mxu0 0.0
    %275 = vmatpush1.msra.mxu0 0.0
    %276 = vmatprep.subr.mxu0 0.0
    %277 = vmatpush1.msra.mxu0 0.0
    %278 = vmatprep.subr.mxu0 0.0
    %279 = vmatpush1.msra.mxu0 0.0
    %280 = vmatprep.subr.mxu0 0.0
    %281 = vmatpush1.msra.mxu0 0.0
    %282 = vmatprep.subr.mxu0 0.0
    %283 = vmatpush1.msra.mxu0 0.0
    %284 = vmatprep.mubr.f32.mxu0 0.0
    %285 = vmatmul.mubr.f32.gmra.mrb[0].mxu0 %v215
    %v286 = vpop.f32.mrb[0].mxu0
    %v287 = vadd.f32 %v207, %v286
    %v288 = vpop.f32.mrb[0].mxu0
    %289 = vmatprep.mubr.f32.mxu0 0.0
    %290 = vmatmul.mubr.f32.gmra.mrb[0].mxu0 %v218
    %v291 = vpop.f32.mrb[0].mxu0
    %v292 = vadd.f32 %v212, %v291
    %v293 = vpop.f32.mrb[0].mxu0
    %294 = vdwg.mxu0
    %v295 = vmul.f32 %v287, 0.5
    %v296 = vmul.f32 %v292, 0.5
    %v297 = vmul.f32 %v287, 0.70710677
    %v298 = vmul.f32 %v292, 0.70710677
    %v299 = verf.f32.pop %v297
    %v300 = verf.f32.pop %v298
    %v301 = vadd.f32 %v299, 1.0
    %v302 = vadd.f32 %v300, 1.0
    %v303 = vmul.f32 %v295, %v301
    %v304 = vmul.f32 %v296, %v302
    %v305 = vld [vmem:[%s7] sm:$0xff]
    %v306 = vld [vmem:[%s7 + $0x8] sm:$0xff]
    %308 = vset.pattern.permute.xlu0 0
    %309 = vperm.xlu0 %308, %v305
    %v310 = vpop.permute.xlu0 %309
    %313 = vset.pattern.permute.xlu0 0
    %314 = vperm.xlu0 %313, %v306
    %v315 = vpop.permute.xlu0 %314
    %v317 = vmul.f32 %v310, %v303
    %v318 = vmul.f32 %v315, %v304
    %v319 = vadd.f32 %v317, %v318
    %v320 = vrot.slane %v319, 4
    %v321 = vadd.f32 %v319, %v320
    %v322 = vrot.slane %v321, 2
    %v323 = vadd.f32 %v321, %v322
    %v324 = vrot.slane %v323, 1
    %v325 = vadd.f32 %v323, %v324
    %v326 = vld [vmem:[#allocation2] sm:$0x1]
    %328 = vset.pattern.permute.xlu0 0
    %329 = vperm.xlu0 %328, %v326
    %v330 = vpop.permute.xlu0 %329
    %v332 = vlaneseq
    %v333 = vshrl.u32 %v332, 7
    %v334 = vsub.s32 0, %v333
    %v335 = vrot.slane %v330, %v334
    %v336 = vadd.f32 %v325, %v335
    %v337 = vsub.f32 %v336, -0.21815601
    %v338 = vxor.u32 %v337, 2147483648
    %v339 = vmul.f32 %v338, 1.442695
    %v340 = vpow.pop %v339
    %v341 = vadd.f32 %v340, 1.0
    %v342 = vrcp.pop %v341
    %v343 = vmul.f32 1.0, %v342
    %v344 = vmul.f32 %v343, 1.804
    %v345 = vsub.f32 %v344, 1.0
    %346 = vst [vmem:[#allocation3] sm:$0x1] %v345
    // Predicated region
    $region38: #{tpu_custom_call.1} parent=1 // pred_check
      _
    $region39: #{tpu_custom_call.1} parent=1 // pred_check_branch
      %348 = sbr.rel (0) target = $region41
    $region40: #{tpu_custom_call.1} parent=1 // pred_region
      %s350 = ssub.s32 16, 16
      %351 = vsyncadd [#allocation4], %s350
      %s353 = sshll.u32 [#allocation3], 4
      %s354 = int_to_ptr.vmem [resolvable:$true] %s353
      %356 = dma.vmem_to_hbm [thread:$0]  %s354, 16, %s9, [#allocation4]
    $region41: #{tpu_custom_call.1} parent=1 // pred_fallthru
      _
    // Predicated region
    $region42: #{tpu_custom_call.1} parent=1 // pred_check
      _
    $region43: #{tpu_custom_call.1} parent=1 // pred_check_branch
      %358 = sbr.rel (0) target = $region45
    $region44: #{tpu_custom_call.1} parent=1 // pred_region
      %359 = dma.done [#allocation4], 16
    $region45: #{tpu_custom_call.1} parent=1 // pred_fallthru
      _
    %360 = vsyncpa [#allocation4], 1

</llo_original>
